<compile_context>
chip_gen: v7x
topology: tpu7x:2x2x1
jax: 0.10.0
libtpu: 0.0.40
codegen_flags: <defaults>
</compile_context>

<pallas_src>
import functools

import numpy as np
import jax
import jax.numpy as jnp
from jax.experimental import pallas as pl
from jax.experimental.pallas import tpu as pltpu

# Static "parameter" of the module: the time indices to keep.
TIME_INDICES = (0, 3, 5, 8, 10, 15)


def _round_up(a, b):
    return ((a + b - 1) // b) * b


def _make_gather_kernel(T, K, L_in, L_out, idx):
    """Single-gather kernel: out[:, o] = x[:, (o // K) * T + idx[o % K]]."""
    idx = tuple(int(i) for i in idx)

    def kernel(x_ref, o_ref):
        x = x_ref[...]                                      # (TM, L_in)
        tm = x.shape[0]
        # Build the (1, L_in) lane map with iota + a short where-chain (avoids
        # relying on dense vector constants); lanes >= L_out are clamped to 0
        # and discarded by the final static slice.
        o = jax.lax.broadcasted_iota(jnp.int32, (1, L_in), 1)
        k = o % K
        off = jnp.full((1, L_in), idx[0], dtype=jnp.int32)
        for kk in range(1, K):
            off = jnp.where(k == kk, idx[kk], off)
        lane = (o // K) * T + off
        lane = jnp.where(o < L_out, lane, 0)
        lane = jnp.broadcast_to(lane, (tm, L_in))
        # Same-shape take_along_axis along lanes: one within-vreg lane gather
        # per vreg (L_in <= 128), then a free vreg-prefix slice to L_out lanes.
        g = jnp.take_along_axis(x, lane, axis=-1, mode="promise_in_bounds")
        o_ref[...] = g[:, :L_out]

    return kernel


def _make_concat_kernel(T, K, G, idx):
    """Fallback: concat of static width-1 lane slices (always lowers, slower)."""
    lane_order = tuple(j * T + int(t) for j in range(G) for t in idx)

    def kernel(x_ref, o_ref):
        x = x_ref[...]                                      # (TM, G*T)
        o_ref[...] = jnp.concatenate(
            [x[:, c:c + 1] for c in lane_order], axis=-1)   # (TM, G*K)

    return kernel


def _time_subsample_2d(x2, idx, use_gather):
    """x2: (M, T) -> (M, K) with K = len(idx)."""
    M, T = x2.shape
    K = len(idx)
    itemsize = jnp.dtype(x2.dtype).itemsize

    # Pack G rows per kernel row so the packed time axis (G*T lanes) fits in a
    # single 128-lane vreg: lane-dense input blocks + within-vreg gather.
    G = max(1, 128 // T)
    M_pad = _round_up(M, G)
    if M_pad != M:
        # TODO(synk): for very large unaligned M, split off the tail instead of
        # padding (jnp.pad copies the input); the aligned common case is free.
        x2 = jnp.pad(x2, ((0, M_pad - M), (0, 0)))
    rows = M_pad // G
    L_in, L_out = G * T, G * K
    xr = x2.reshape(rows, L_in)                             # contiguous view

    # Row-tile selection.  VMEM budget counts the output block at its
    # 128-lane-PADDED size and double buffering, so it stays well under the
    # v5e 16 MiB scoped default (v6e/v7x: 32 MiB).  Cap at cdiv(rows, 2) so the
    # "parallel" grid has >= 2 steps for v7x's two TensorCores.
    if rows <= 8:
        TM = rows                                           # full extent
    else:
        budget = (12 << 20) if use_gather else (2 << 20)
        per_row = (_round_up(L_in, 128) + _round_up(L_out, 128)) * itemsize * 2
        TM = max(8, min(budget // per_row, _round_up(pl.cdiv(rows, 2), 8)))
        TM = (TM // 8) * 8
    grid = (pl.cdiv(rows, TM),)

    kernel = (_make_gather_kernel(T, K, L_in, L_out, idx) if use_gather
              else _make_concat_kernel(T, K, G, idx))

    cost = pl.CostEstimate(
        flops=0,
        transcendentals=0,
        bytes_accessed=M_pad * (T + K) * itemsize,          # pure memory movement
    )

    out = pl.pallas_call(
        kernel,
        out_shape=jax.ShapeDtypeStruct((rows, L_out), x2.dtype),
        grid=grid,
        in_specs=[pl.BlockSpec((TM, L_in), lambda i: (i, 0))],
        out_specs=pl.BlockSpec((TM, L_out), lambda i: (i, 0)),
        compiler_params=pltpu.CompilerParams(
            dimension_semantics=("parallel",),              # independent row tiles
        ),
        cost_estimate=cost,
    )(xr)

    out = out.reshape(M_pad, K)
    if M_pad != M:
        out = out[:M]
    return out


@functools.cache
def _gather_supported(T, K, idx, dtype_name):
    """Probe once whether the single-op lane-gather kernel lowers and is exact."""
    try:
        dtype = jnp.dtype(dtype_name)
        probe = jnp.arange(64 * T, dtype=jnp.float32).astype(dtype).reshape(64, T)
        got = _time_subsample_2d(probe, idx, use_gather=True)
        got = jax.block_until_ready(got)
        ref = probe[:, np.asarray(idx)]
        return bool(jnp.array_equal(got, ref))
    except Exception:
        return False


def time_subsample(x, time_indices=TIME_INDICES):
    """Pallas TPU equivalent of TimeSubsampleTransform.forward: x[..., time_indices]."""
    *lead, T = x.shape
    idx = tuple(int(i) % T for i in time_indices)           # normalize negatives
    K = len(idx)
    M = int(np.prod(lead, dtype=np.int64)) if lead else 1

    x2 = x.reshape(M, T)
    use_gather = _gather_supported(T, K, idx, jnp.dtype(x.dtype).name)
    out2 = _time_subsample_2d(x2, idx, use_gather=use_gather)
    return out2.reshape(*lead, K)


if __name__ == "__main__":
    key = jax.random.PRNGKey(0)
    # Small shapes consistent with the forward: (B, C, H, T) with time last.
    x = jax.random.normal(key, (2, 4, 16, 16), dtype=jnp.float32)

    y = time_subsample(x, TIME_INDICES)
    y = jax.block_until_ready(y)

    # Reference semantics: x[..., time_indices]
    ref = x[..., jnp.asarray(TIME_INDICES)]
    assert y.shape == ref.shape, (y.shape, ref.shape)
    assert y.dtype == x.dtype
    np.testing.assert_allclose(np.asarray(y), np.asarray(ref), rtol=0, atol=0)

    print("KERNEL_OK")
</pallas_src>

<mosaic_0001>
module attributes {stable_mosaic.version = 11 : i64} {
  func.func @kernel(%arg0: i32, %arg1: memref<8x128xf32, #tpu.memory_space<vmem>>, %arg2: memref<8x48xf32, #tpu.memory_space<vmem>>) attributes {dimension_semantics = [#tpu.dimension_semantics<parallel>], iteration_bounds = array<i64: 2>, scalar_prefetch = 0 : i64, scratch_operands = 0 : i64, tpu.core_type = #tpu.core_type<tc>, window_params = [{transform_indices = @transform_0, window_bounds = array<i64: 8, 128>}, {transform_indices = @transform_1, window_bounds = array<i64: 8, 48>}]} {
    %c0 = arith.constant 0 : index
    %c0_0 = arith.constant 0 : index
    %0 = vector.load %arg1[%c0, %c0_0] : memref<8x128xf32, #tpu.memory_space<vmem>>, vector<8x128xf32>
    %1 = vector.extract_strided_slice %0 {offsets = [0, 0], sizes = [8, 1], strides = [1, 1]} : vector<8x128xf32> to vector<8x1xf32>
    %2 = vector.extract_strided_slice %0 {offsets = [0, 3], sizes = [8, 1], strides = [1, 1]} : vector<8x128xf32> to vector<8x1xf32>
    %3 = vector.extract_strided_slice %0 {offsets = [0, 5], sizes = [8, 1], strides = [1, 1]} : vector<8x128xf32> to vector<8x1xf32>
    %4 = vector.extract_strided_slice %0 {offsets = [0, 8], sizes = [8, 1], strides = [1, 1]} : vector<8x128xf32> to vector<8x1xf32>
    %5 = vector.extract_strided_slice %0 {offsets = [0, 10], sizes = [8, 1], strides = [1, 1]} : vector<8x128xf32> to vector<8x1xf32>
    %6 = vector.extract_strided_slice %0 {offsets = [0, 15], sizes = [8, 1], strides = [1, 1]} : vector<8x128xf32> to vector<8x1xf32>
    %7 = vector.extract_strided_slice %0 {offsets = [0, 16], sizes = [8, 1], strides = [1, 1]} : vector<8x128xf32> to vector<8x1xf32>
    %8 = vector.extract_strided_slice %0 {offsets = [0, 19], sizes = [8, 1], strides = [1, 1]} : vector<8x128xf32> to vector<8x1xf32>
    %9 = vector.extract_strided_slice %0 {offsets = [0, 21], sizes = [8, 1], strides = [1, 1]} : vector<8x128xf32> to vector<8x1xf32>
    %10 = vector.extract_strided_slice %0 {offsets = [0, 24], sizes = [8, 1], strides = [1, 1]} : vector<8x128xf32> to vector<8x1xf32>
    %11 = vector.extract_strided_slice %0 {offsets = [0, 26], sizes = [8, 1], strides = [1, 1]} : vector<8x128xf32> to vector<8x1xf32>
    %12 = vector.extract_strided_slice %0 {offsets = [0, 31], sizes = [8, 1], strides = [1, 1]} : vector<8x128xf32> to vector<8x1xf32>
    %13 = vector.extract_strided_slice %0 {offsets = [0, 32], sizes = [8, 1], strides = [1, 1]} : vector<8x128xf32> to vector<8x1xf32>
    %14 = vector.extract_strided_slice %0 {offsets = [0, 35], sizes = [8, 1], strides = [1, 1]} : vector<8x128xf32> to vector<8x1xf32>
    %15 = vector.extract_strided_slice %0 {offsets = [0, 37], sizes = [8, 1], strides = [1, 1]} : vector<8x128xf32> to vector<8x1xf32>
    %16 = vector.extract_strided_slice %0 {offsets = [0, 40], sizes = [8, 1], strides = [1, 1]} : vector<8x128xf32> to vector<8x1xf32>
    %17 = vector.extract_strided_slice %0 {offsets = [0, 42], sizes = [8, 1], strides = [1, 1]} : vector<8x128xf32> to vector<8x1xf32>
    %18 = vector.extract_strided_slice %0 {offsets = [0, 47], sizes = [8, 1], strides = [1, 1]} : vector<8x128xf32> to vector<8x1xf32>
    %19 = vector.extract_strided_slice %0 {offsets = [0, 48], sizes = [8, 1], strides = [1, 1]} : vector<8x128xf32> to vector<8x1xf32>
    %20 = vector.extract_strided_slice %0 {offsets = [0, 51], sizes = [8, 1], strides = [1, 1]} : vector<8x128xf32> to vector<8x1xf32>
    %21 = vector.extract_strided_slice %0 {offsets = [0, 53], sizes = [8, 1], strides = [1, 1]} : vector<8x128xf32> to vector<8x1xf32>
    %22 = vector.extract_strided_slice %0 {offsets = [0, 56], sizes = [8, 1], strides = [1, 1]} : vector<8x128xf32> to vector<8x1xf32>
    %23 = vector.extract_strided_slice %0 {offsets = [0, 58], sizes = [8, 1], strides = [1, 1]} : vector<8x128xf32> to vector<8x1xf32>
    %24 = vector.extract_strided_slice %0 {offsets = [0, 63], sizes = [8, 1], strides = [1, 1]} : vector<8x128xf32> to vector<8x1xf32>
    %25 = vector.extract_strided_slice %0 {offsets = [0, 64], sizes = [8, 1], strides = [1, 1]} : vector<8x128xf32> to vector<8x1xf32>
    %26 = vector.extract_strided_slice %0 {offsets = [0, 67], sizes = [8, 1], strides = [1, 1]} : vector<8x128xf32> to vector<8x1xf32>
    %27 = vector.extract_strided_slice %0 {offsets = [0, 69], sizes = [8, 1], strides = [1, 1]} : vector<8x128xf32> to vector<8x1xf32>
    %28 = vector.extract_strided_slice %0 {offsets = [0, 72], sizes = [8, 1], strides = [1, 1]} : vector<8x128xf32> to vector<8x1xf32>
    %29 = vector.extract_strided_slice %0 {offsets = [0, 74], sizes = [8, 1], strides = [1, 1]} : vector<8x128xf32> to vector<8x1xf32>
    %30 = vector.extract_strided_slice %0 {offsets = [0, 79], sizes = [8, 1], strides = [1, 1]} : vector<8x128xf32> to vector<8x1xf32>
    %31 = vector.extract_strided_slice %0 {offsets = [0, 80], sizes = [8, 1], strides = [1, 1]} : vector<8x128xf32> to vector<8x1xf32>
    %32 = vector.extract_strided_slice %0 {offsets = [0, 83], sizes = [8, 1], strides = [1, 1]} : vector<8x128xf32> to vector<8x1xf32>
    %33 = vector.extract_strided_slice %0 {offsets = [0, 85], sizes = [8, 1], strides = [1, 1]} : vector<8x128xf32> to vector<8x1xf32>
    %34 = vector.extract_strided_slice %0 {offsets = [0, 88], sizes = [8, 1], strides = [1, 1]} : vector<8x128xf32> to vector<8x1xf32>
    %35 = vector.extract_strided_slice %0 {offsets = [0, 90], sizes = [8, 1], strides = [1, 1]} : vector<8x128xf32> to vector<8x1xf32>
    %36 = vector.extract_strided_slice %0 {offsets = [0, 95], sizes = [8, 1], strides = [1, 1]} : vector<8x128xf32> to vector<8x1xf32>
    %37 = vector.extract_strided_slice %0 {offsets = [0, 96], sizes = [8, 1], strides = [1, 1]} : vector<8x128xf32> to vector<8x1xf32>
    %38 = vector.extract_strided_slice %0 {offsets = [0, 99], sizes = [8, 1], strides = [1, 1]} : vector<8x128xf32> to vector<8x1xf32>
    %39 = vector.extract_strided_slice %0 {offsets = [0, 101], sizes = [8, 1], strides = [1, 1]} : vector<8x128xf32> to vector<8x1xf32>
    %40 = vector.extract_strided_slice %0 {offsets = [0, 104], sizes = [8, 1], strides = [1, 1]} : vector<8x128xf32> to vector<8x1xf32>
    %41 = vector.extract_strided_slice %0 {offsets = [0, 106], sizes = [8, 1], strides = [1, 1]} : vector<8x128xf32> to vector<8x1xf32>
    %42 = vector.extract_strided_slice %0 {offsets = [0, 111], sizes = [8, 1], strides = [1, 1]} : vector<8x128xf32> to vector<8x1xf32>
    %43 = vector.extract_strided_slice %0 {offsets = [0, 112], sizes = [8, 1], strides = [1, 1]} : vector<8x128xf32> to vector<8x1xf32>
    %44 = vector.extract_strided_slice %0 {offsets = [0, 115], sizes = [8, 1], strides = [1, 1]} : vector<8x128xf32> to vector<8x1xf32>
    %45 = vector.extract_strided_slice %0 {offsets = [0, 117], sizes = [8, 1], strides = [1, 1]} : vector<8x128xf32> to vector<8x1xf32>
    %46 = vector.extract_strided_slice %0 {offsets = [0, 120], sizes = [8, 1], strides = [1, 1]} : vector<8x128xf32> to vector<8x1xf32>
    %47 = vector.extract_strided_slice %0 {offsets = [0, 122], sizes = [8, 1], strides = [1, 1]} : vector<8x128xf32> to vector<8x1xf32>
    %48 = vector.extract_strided_slice %0 {offsets = [0, 127], sizes = [8, 1], strides = [1, 1]} : vector<8x128xf32> to vector<8x1xf32>
    %49 = tpu.concatenate %1, %2, %3, %4, %5, %6, %7, %8, %9, %10, %11, %12, %13, %14, %15, %16 in 1 : vector<8x1xf32>, vector<8x1xf32>, vector<8x1xf32>, vector<8x1xf32>, vector<8x1xf32>, vector<8x1xf32>, vector<8x1xf32>, vector<8x1xf32>, vector<8x1xf32>, vector<8x1xf32>, vector<8x1xf32>, vector<8x1xf32>, vector<8x1xf32>, vector<8x1xf32>, vector<8x1xf32>, vector<8x1xf32> -> vector<8x16xf32>
    %50 = tpu.concatenate %17, %18, %19, %20, %21, %22, %23, %24, %25, %26, %27, %28, %29, %30, %31, %32 in 1 : vector<8x1xf32>, vector<8x1xf32>, vector<8x1xf32>, vector<8x1xf32>, vector<8x1xf32>, vector<8x1xf32>, vector<8x1xf32>, vector<8x1xf32>, vector<8x1xf32>, vector<8x1xf32>, vector<8x1xf32>, vector<8x1xf32>, vector<8x1xf32>, vector<8x1xf32>, vector<8x1xf32>, vector<8x1xf32> -> vector<8x16xf32>
    %51 = tpu.concatenate %33, %34, %35, %36, %37, %38, %39, %40, %41, %42, %43, %44, %45, %46, %47, %48 in 1 : vector<8x1xf32>, vector<8x1xf32>, vector<8x1xf32>, vector<8x1xf32>, vector<8x1xf32>, vector<8x1xf32>, vector<8x1xf32>, vector<8x1xf32>, vector<8x1xf32>, vector<8x1xf32>, vector<8x1xf32>, vector<8x1xf32>, vector<8x1xf32>, vector<8x1xf32>, vector<8x1xf32>, vector<8x1xf32> -> vector<8x16xf32>
    %52 = tpu.concatenate %49, %50, %51 in 1 : vector<8x16xf32>, vector<8x16xf32>, vector<8x16xf32> -> vector<8x48xf32>
    %c0_1 = arith.constant 0 : index
    %c0_2 = arith.constant 0 : index
    %53 = vector.load %arg2[%c0_1, %c0_2] : memref<8x48xf32, #tpu.memory_space<vmem>>, vector<8x48xf32>
    tpu.vector_store %arg2[%c0_1, %c0_2], %52 {strides = array<i32>} : memref<8x48xf32, #tpu.memory_space<vmem>>, vector<8x48xf32>,
    return
  }
  func.func @transform_0(%arg0: i32) -> (i32, i32) {
    %c0_i32 = arith.constant 0 : i32
    %c0_i32_0 = arith.constant 0 : i32
    return %arg0, %c0_i32 : i32, i32
  }
  func.func @transform_1(%arg0: i32) -> (i32, i32) {
    %c0_i32 = arith.constant 0 : i32
    %c0_i32_0 = arith.constant 0 : i32
    return %arg0, %c0_i32 : i32, i32
  }
}

</mosaic_0001>

<llo_original>
// kernel: tpu_custom_call.1
$region0: #{tpu_custom_call.1}
  #allocation0 [shape = 'u32[]', space=smem, size = 0x4, offset = 0x4, fixed_abs, tag = 'smem constant byte address 0x4 - core index']
  #allocation1 [shape = 'u32[144,128]{1,0:T(1,128)}', space=vmem, size = 0x12000, scoped, tag = 'internal scratch']
  %s0 = inlined_call_operand.hbm [shape: f32[16,128], index: 0, kind: input, shape index: {}]
  %s1 = inlined_call_operand.hbm [shape: f32[16,48], index: 1, kind: output, shape index: {}]
  %s2 = sld [smem:[#allocation0]]
  $region41: #{tpu_custom_call.1} parent=0
    _
  %s4 = ssub.s32 1, %s2
  %s5 = scalar_select 0, %s4, %s2
  $region1: #{tpu_custom_call.1} parent=0
    #allocation2 [shape = 'u8[8192]{0}', space=vmem, size = 0x2000, scoped, tag = 'input window, operand 0']
    #allocation3 [shape = 's32[2]{0}', space=sflag, size = 0x8, scoped, tag = 'scoped memory for tpu_custom_call.1']
    #allocation4 [shape = 's32[2]{0}', space=sflag, size = 0x8, scoped, tag = 'scoped memory for tpu_custom_call.1']
    #allocation5 [shape = 'u8[8192]{0}', space=vmem, size = 0x2000, scoped, tag = 'output window, operand 0']
    %6 = vsyncpa [#allocation3], 0
    %s7 = scalar_lea.sflag [#allocation3], 1
    %8 = vsyncpa %s7, 0
    %9 = vsyncpa [#allocation4], 0
    %s10 = scalar_lea.sflag [#allocation4], 1
    %11 = vsyncpa %s10, 0
    loop: start=0, step=1, limit=4
    $region2: #{tpu_custom_call.1} parent=1 // loop_pre_header
      _
    $region3: #{tpu_custom_call.1} parent=1 // loop_header
      %s13 = sphi 0, %s17
      %p14 = scmp.ge.s32.totalorder %s13, 4
      %s23 = sphi 0, %s25
      %s26 = sphi 0, %s23
      %s27 = sphi 0, %s26
      %s43 = sphi 0, %s27
      %s49 = sphi 0, %s51
      %s52 = sphi 0, %s49
      %s53 = sphi 0, %s52
      %s69 = sphi 0, %s53
    $region4: #{tpu_custom_call.1} parent=1 // loop_header_branch
      %16 = sbr.rel (%p14) target = $region8
    $region5: #{tpu_custom_call.1} parent=1 // loop_body
      %s18 = ssub.s32 %s13, 1
      %s19 = ssub.s32 %s13, 2
      %s20 = sadd.s32 %s13, 1
      %s21 = ssub.s32 %s13, %s20
      %p22 = scmp.eq.s32.totalorder %s21, 0
      %s24 = sadd.s32 %s23, 1
      %s25 = scalar_select %p22, %s23, %s24
      %p28 = pneg %p22
      %p29 = scmp.eq.s32.totalorder %s13, 1
      %p30 = por %p28, %p29
      %p31 = scmp.ne.s32.totalorder %s23, %s26
      %p32 = scmp.eq.s32.totalorder %s13, 0
      %p33 = por %p31, %p32
      %p34 = scmp.ne.s32.totalorder %s23, %s26
      %p35 = scmp.eq.s32.totalorder %s18, 1
      %p36 = por %p34, %p35
      %p37 = scmp.ne.s32.totalorder %s26, %s27
      %p38 = scmp.eq.s32.totalorder %s18, 0
      %p39 = por %p37, %p38
      %p40 = scmp.ne.s32.totalorder %s26, %s27
      %p41 = scmp.eq.s32.totalorder %s19, 1
      %p42 = por %p40, %p41
      %p44 = scmp.ne.s32.totalorder %s27, %s43
      %p45 = scmp.eq.s32.totalorder %s19, 0
      %p46 = por %p44, %p45
      %s47 = ssub.s32 %s13, %s20
      %p48 = scmp.eq.s32.totalorder %s47, 0
      %s50 = sadd.s32 %s49, 1
      %s51 = scalar_select %p48, %s49, %s50
      %p54 = pneg %p48
      %p55 = scmp.eq.s32.totalorder %s13, 1
      %p56 = por %p54, %p55
      %p57 = scmp.ne.s32.totalorder %s49, %s52
      %p58 = scmp.eq.s32.totalorder %s13, 0
      %p59 = por %p57, %p58
      %p60 = scmp.ne.s32.totalorder %s49, %s52
      %p61 = scmp.eq.s32.totalorder %s18, 1
      %p62 = por %p60, %p61
      %p63 = scmp.ne.s32.totalorder %s52, %s53
      %p64 = scmp.eq.s32.totalorder %s18, 0
      %p65 = por %p63, %p64
      %p66 = scmp.ne.s32.totalorder %s52, %s53
      %p67 = scmp.eq.s32.totalorder %s19, 1
      %p68 = por %p66, %p67
      %p70 = scmp.ne.s32.totalorder %s53, %s69
      %p71 = scmp.eq.s32.totalorder %s19, 0
      %p72 = por %p70, %p71
      %p73 = scmp.le.s32.totalorder 1, %s13
      %p74 = scmp.lt.s32.totalorder %s13, 3
      %p75 = pnand %p73, %p74
      %p76 = pneg %p75
      // Predicated region
      $region9: #{tpu_custom_call.1} parent=5 // pred_check
        _
      $region10: #{tpu_custom_call.1} parent=5 // pred_check_branch
        %78 = sbr.rel (%p75) target = $region12
      $region11: #{tpu_custom_call.1} parent=5 // pred_region
        %s79 = ssub.s32 %s13, 1
      $region12: #{tpu_custom_call.1} parent=5 // pred_fallthru
        _
      %p80 = scmp.lt.s32.totalorder %s13, 2
      // Predicated region
      $region13: #{tpu_custom_call.1} parent=5 // pred_check
        %p81 = pneg %p80
      $region14: #{tpu_custom_call.1} parent=5 // pred_check_branch
        %83 = sbr.rel (%p81) target = $region16
      $region15: #{tpu_custom_call.1} parent=5 // pred_region
        // Predicated region
        $region17: #{tpu_custom_call.1} parent=15 // pred_check
          %p84 = pneg %p33
        $region18: #{tpu_custom_call.1} parent=15 // pred_check_branch
          %86 = sbr.rel (%p84) target = $region20
        $region19: #{tpu_custom_call.1} parent=15 // pred_region
          %s87 = sand.u32 %s23, 1
          %s88 = scalar_lea.sflag [#allocation3], %s87
          %s89 = sand.u32 %s23, 1
          %s90 = smul.addr %s89, 8
          %s91 = scalar_lea.vmem [#allocation2], %s90
          %s93 = ssub.s32 128, 128
          %94 = vsyncadd %s88, %s93
          %s95 = smul.addr %s13, 128
          %s96 = scalar_lea.hbm %s0, %s95
          %s98 = sshll.u32 %s91, 4
          %s99 = int_to_ptr.vmem [resolvable:$true] %s98
          %101 = dma.hbm_to_vmem [thread:$0]  %s96, 128, %s99, %s88
        $region20: #{tpu_custom_call.1} parent=15 // pred_fallthru
          _
      $region16: #{tpu_custom_call.1} parent=5 // pred_fallthru
        _
      %p102 = scmp.le.s32.totalorder 1, %s13
      %p103 = scmp.lt.s32.totalorder %s13, 3
      %p104 = pnand %p102, %p103
      %p105 = pneg %p104
      // Predicated region
      $region21: #{tpu_custom_call.1} parent=5 // pred_check
        _
      $region22: #{tpu_custom_call.1} parent=5 // pred_check_branch
        %107 = sbr.rel (%p104) target = $region24
      $region23: #{tpu_custom_call.1} parent=5 // pred_region
        %s108 = ssub.s32 %s13, 1
        %s109 = sand.u32 %s26, 1
        %s110 = scalar_lea.sflag [#allocation3], %s109
        %s111 = sand.u32 %s26, 1
        %s112 = smul.addr %s111, 8
        %s113 = scalar_lea.vmem [#allocation2], %s112
        // Predicated region
        $region25: #{tpu_custom_call.1} parent=23 // pred_check
          %p114 = pneg %p39
        $region26: #{tpu_custom_call.1} parent=23 // pred_check_branch
          %116 = sbr.rel (%p114) target = $region28
        $region27: #{tpu_custom_call.1} parent=23 // pred_region
          %117 = dma.done %s110, 128
        $region28: #{tpu_custom_call.1} parent=23 // pred_fallthru
          _
        %s118 = sand.u32 %s26, 1
        %s119 = scalar_lea.sflag [#allocation3], %s118
        %s120 = sand.u32 %s26, 1
        %s121 = smul.addr %s120, 8
        %s122 = scalar_lea.vmem [#allocation2], %s121
        %p123 = pneg %p39
        %p124 = pneg %p36
        %p125 = pneg %p65
        %p126 = pneg %p62
        %s127 = sand.u32 %s52, 1
        %s128 = scalar_lea.sflag [#allocation4], %s127
        %s129 = sand.u32 %s52, 1
        %s130 = smul.addr %s129, 8
        %s131 = scalar_lea.vmem [#allocation5], %s130
        %v132 = vld [vmem:[%s113] sm:$0xff]
        %134 = vrot.lane.b32.xlu0 %v132, 126
        %v135 = vpop.permute.xlu0 %134
        %137 = vrot.lane.b32.xlu0 %v132, 125
        %v138 = vpop.permute.xlu0 %137
        %140 = vrot.lane.b32.xlu0 %v132, 123
        %v141 = vpop.permute.xlu0 %140
        %143 = vrot.lane.b32.xlu0 %v132, 122
        %v144 = vpop.permute.xlu0 %143
        %146 = vrot.lane.b32.xlu0 %v132, 118
        %v147 = vpop.permute.xlu0 %146
        %149 = vrot.lane.b32.xlu0 %v132, 116
        %v150 = vpop.permute.xlu0 %149
        %152 = vrot.lane.b32.xlu0 %v132, 115
        %v153 = vpop.permute.xlu0 %152
        %155 = vrot.lane.b32.xlu0 %v132, 113
        %v156 = vpop.permute.xlu0 %155
        %158 = vrot.lane.b32.xlu0 %v132, 112
        %v159 = vpop.permute.xlu0 %158
        %161 = vrot.lane.b32.xlu0 %v132, 108
        %v162 = vpop.permute.xlu0 %161
        %164 = vrot.lane.b32.xlu0 %v132, 106
        %v165 = vpop.permute.xlu0 %164
        %167 = vrot.lane.b32.xlu0 %v132, 105
        %v168 = vpop.permute.xlu0 %167
        %170 = vrot.lane.b32.xlu0 %v132, 103
        %v171 = vpop.permute.xlu0 %170
        %vm173 = vcmask 7168
        %v174 = vsel %vm173, %v132, %v135
        %vm175 = vcmask 15360
        %v176 = vsel %vm175, %v174, %v138
        %vm177 = vcmask 23552
        %v178 = vsel %vm177, %v176, %v141
        %vm179 = vcmask 31744
        %v180 = vsel %vm179, %v178, %v144
        %vm181 = vcmask 39936
        %v182 = vsel %vm181, %v180, %v147
        %vm183 = vcmask 48128
        %v184 = vsel %vm183, %v182, %v147
        %vm185 = vcmask 56320
        %v186 = vsel %vm185, %v184, %v150
        %vm187 = vcmask 64512
        %v188 = vsel %vm187, %v186, %v153
        %vm189 = vcmask 72704
        %v190 = vsel %vm189, %v188, %v156
        %vm191 = vcmask 80896
        %v192 = vsel %vm191, %v190, %v159
        %vm193 = vcmask 89088
        %v194 = vsel %vm193, %v192, %v162
        %vm195 = vcmask 97280
        %v196 = vsel %vm195, %v194, %v162
        %vm197 = vcmask 105472
        %v198 = vsel %vm197, %v196, %v165
        %vm199 = vcmask 113664
        %v200 = vsel %vm199, %v198, %v168
        %vm201 = vcmask 121856
        %v202 = vsel %vm201, %v200, %v171
        %203 = vrot.lane.b32.xlu0 %v132, 86
        %v204 = vpop.permute.xlu0 %203
        %206 = vrot.lane.b32.xlu0 %v132, 82
        %v207 = vpop.permute.xlu0 %206
        %209 = vrot.lane.b32.xlu0 %v132, 80
        %v210 = vpop.permute.xlu0 %209
        %212 = vrot.lane.b32.xlu0 %v132, 79
        %v213 = vpop.permute.xlu0 %212
        %215 = vrot.lane.b32.xlu0 %v132, 77
        %v216 = vpop.permute.xlu0 %215
        %218 = vrot.lane.b32.xlu0 %v132, 76
        %v219 = vpop.permute.xlu0 %218
        %221 = vrot.lane.b32.xlu0 %v132, 72
        %v222 = vpop.permute.xlu0 %221
        %224 = vrot.lane.b32.xlu0 %v132, 70
        %v225 = vpop.permute.xlu0 %224
        %227 = vrot.lane.b32.xlu0 %v132, 69
        %v228 = vpop.permute.xlu0 %227
        %230 = vrot.lane.b32.xlu0 %v132, 67
        %v231 = vpop.permute.xlu0 %230
        %233 = vrot.lane.b32.xlu0 %v132, 66
        %v234 = vpop.permute.xlu0 %233
        %236 = vrot.lane.b32.xlu0 %v132, 62
        %v237 = vpop.permute.xlu0 %236
        %239 = vrot.lane.b32.xlu0 %v132, 60
        %v240 = vpop.permute.xlu0 %239
        %v242 = vsel %vm173, %v204, %v207
        %v243 = vsel %vm175, %v242, %v207
        %v244 = vsel %vm177, %v243, %v210
        %v245 = vsel %vm179, %v244, %v213
        %v246 = vsel %vm181, %v245, %v216
        %v247 = vsel %vm183, %v246, %v219
        %v248 = vsel %vm185, %v247, %v222
        %v249 = vsel %vm187, %v248, %v222
        %v250 = vsel %vm189, %v249, %v225
        %v251 = vsel %vm191, %v250, %v228
        %v252 = vsel %vm193, %v251, %v231
        %v253 = vsel %vm195, %v252, %v234
        %v254 = vsel %vm197, %v253, %v237
        %v255 = vsel %vm199, %v254, %v237
        %v256 = vsel %vm201, %v255, %v240
        %257 = vrot.lane.b32.xlu0 %v132, 43
        %v258 = vpop.permute.xlu0 %257
        %260 = vrot.lane.b32.xlu0 %v132, 41
        %v261 = vpop.permute.xlu0 %260
        %263 = vrot.lane.b32.xlu0 %v132, 40
        %v264 = vpop.permute.xlu0 %263
        %266 = vrot.lane.b32.xlu0 %v132, 36
        %v267 = vpop.permute.xlu0 %266
        %269 = vrot.lane.b32.xlu0 %v132, 34
        %v270 = vpop.permute.xlu0 %269
        %272 = vrot.lane.b32.xlu0 %v132, 33
        %v273 = vpop.permute.xlu0 %272
        %275 = vrot.lane.b32.xlu0 %v132, 31
        %v276 = vpop.permute.xlu0 %275
        %278 = vrot.lane.b32.xlu0 %v132, 30
        %v279 = vpop.permute.xlu0 %278
        %281 = vrot.lane.b32.xlu0 %v132, 26
        %v282 = vpop.permute.xlu0 %281
        %284 = vrot.lane.b32.xlu0 %v132, 24
        %v285 = vpop.permute.xlu0 %284
        %287 = vrot.lane.b32.xlu0 %v132, 23
        %v288 = vpop.permute.xlu0 %287
        %290 = vrot.lane.b32.xlu0 %v132, 21
        %v291 = vpop.permute.xlu0 %290
        %293 = vrot.lane.b32.xlu0 %v132, 20
        %v294 = vpop.permute.xlu0 %293
        %296 = vrot.lane.b32.xlu0 %v132, 16
        %v297 = vpop.permute.xlu0 %296
        %v299 = vsel %vm173, %v258, %v261
        %v300 = vsel %vm175, %v299, %v264
        %v301 = vsel %vm177, %v300, %v267
        %v302 = vsel %vm179, %v301, %v267
        %v303 = vsel %vm181, %v302, %v270
        %v304 = vsel %vm183, %v303, %v273
        %v305 = vsel %vm185, %v304, %v276
        %v306 = vsel %vm187, %v305, %v279
        %v307 = vsel %vm189, %v306, %v282
        %v308 = vsel %vm191, %v307, %v282
        %v309 = vsel %vm193, %v308, %v285
        %v310 = vsel %vm195, %v309, %v288
        %v311 = vsel %vm197, %v310, %v291
        %v312 = vsel %vm199, %v311, %v294
        %v313 = vsel %vm201, %v312, %v297
        %315 = vrot.lane.b32.xlu0 %v256, 16
        %v316 = vpop.permute.xlu0 %315
        %319 = vrot.lane.b32.xlu0 %v313, 32
        %v320 = vpop.permute.xlu0 %319
        %vm322 = vcmask 130048
        %v323 = vsel %vm322, %v202, %v316
        %vm324 = vcmask 261120
        %v325 = vsel %vm324, %v323, %v320
        %vm326 = vcmask 392192
        %327 = vst.msk [vmem:[%s131] sm:$0xff] %vm326, %v325
        %s328 = sand.u32 %s52, 1
        %s329 = scalar_lea.sflag [#allocation4], %s328
        %s330 = sand.u32 %s52, 1
        %s331 = smul.addr %s330, 8
        %s332 = scalar_lea.vmem [#allocation5], %s331
        // Predicated region
        $region29: #{tpu_custom_call.1} parent=23 // pred_check
          %p333 = pneg %p62
        $region30: #{tpu_custom_call.1} parent=23 // pred_check_branch
          %335 = sbr.rel (%p333) target = $region32
        $region31: #{tpu_custom_call.1} parent=23 // pred_region
          %s337 = ssub.s32 128, 128
          %338 = vsyncadd %s329, %s337
          %s339 = smul.addr %s18, 128
          %s340 = scalar_lea.hbm %s1, %s339
          %s342 = sshll.u32 %s332, 4
          %s343 = int_to_ptr.vmem [resolvable:$true] %s342
          %345 = dma.vmem_to_hbm [thread:$0]  %s343, 128, %s340, %s329
        $region32: #{tpu_custom_call.1} parent=23 // pred_fallthru
          _
      $region24: #{tpu_custom_call.1} parent=5 // pred_fallthru
        _
      %p346 = scmp.le.s32.totalorder 2, %s13
      // Predicated region
      $region33: #{tpu_custom_call.1} parent=5 // pred_check
        %p347 = pneg %p346
      $region34: #{tpu_custom_call.1} parent=5 // pred_check_branch
        %349 = sbr.rel (%p347) target = $region36
      $region35: #{tpu_custom_call.1} parent=5 // pred_region
        %s350 = ssub.s32 %s13, 2
        // Predicated region
        $region37: #{tpu_custom_call.1} parent=35 // pred_check
          %p351 = pneg %p68
        $region38: #{tpu_custom_call.1} parent=35 // pred_check_branch
          %353 = sbr.rel (%p351) target = $region40
        $region39: #{tpu_custom_call.1} parent=35 // pred_region
          %s354 = sand.u32 %s53, 1
          %s355 = scalar_lea.sflag [#allocation4], %s354
          %s356 = sand.u32 %s53, 1
          %s357 = smul.addr %s356, 8
          %s358 = scalar_lea.vmem [#allocation5], %s357
          %359 = dma.done %s355, 128
        $region40: #{tpu_custom_call.1} parent=35 // pred_fallthru
          _
      $region36: #{tpu_custom_call.1} parent=5 // pred_fallthru
        _
    $region6: #{tpu_custom_call.1} parent=1 // loop_footer
      %s17 = sadd.s32 1, %s13
    $region7: #{tpu_custom_call.1} parent=1 // loop_footer_branch
      %12 = sbr.rel target = $region3
    $region8: #{tpu_custom_call.1} parent=1 // loop_exit
      _
    %360 = vsyncpa [#allocation3], 1
    %s361 = scalar_lea.sflag [#allocation3], 1
    %362 = vsyncpa %s361, 1
    %363 = vsyncpa [#allocation4], 1
    %s364 = scalar_lea.sflag [#allocation4], 1
    %365 = vsyncpa %s364, 1

</llo_original>
